<compile_context>
chip_gen: v5e
topology: v5e:2x2
jax: 0.10.0
libtpu: 0.0.40
codegen_flags: <defaults>
</compile_context>

<pallas_src>
import functools
import math

import jax
import jax.numpy as jnp
from jax.experimental import pallas as pl
from jax.experimental.pallas import tpu as pltpu


def build_positional_encoding(d_model, max_len=1024, scale_factor=1.0, dtype=jnp.float32):
    """Sin/cos table matching the torch __init__, kept compact as [max_len, d_model]."""
    assert d_model % 2 == 0, "d_model must be even (same restriction as the torch module)"
    position = jnp.arange(max_len, dtype=jnp.float32)[:, None]                       # (L, 1)
    div_term = jnp.exp(jnp.arange(0, d_model, 2, dtype=jnp.float32)
                       * (-math.log(10000.0) / d_model))                             # (D/2,)
    angles = position * div_term                                                     # (L, D/2)
    pe = jnp.zeros((max_len, d_model), jnp.float32)
    pe = pe.at[:, 0::2].set(jnp.sin(angles))
    pe = pe.at[:, 1::2].set(jnp.cos(angles))
    return (scale_factor * pe).astype(dtype)                                         # (L, D)


def _cdiv(a, b):
    return -(-a // b)


def _pe_dropout_kernel(seed_ref, x_ref, pe_ref, o_ref, *, seq_tile, dropout_p):
    # x_ref / o_ref: (tS, Wx) lane-dense slab.  pe_ref: (tS, W) with Wx % W == 0 and every
    # multi-chunk case guaranteed W % 128 == 0 by the wrapper, so chunk slices are aligned.
    tS, Wx = x_ref.shape
    W = pe_ref.shape[1]
    reps = Wx // W
    pe_blk = pe_ref[...]                                            # streamed (tS, W) tile

    if dropout_p > 0.0:
        keep_scale = jnp.asarray(1.0 / (1.0 - dropout_p), dtype=x_ref.dtype)
        thresh = jnp.int32(int(round(dropout_p * (1 << 23))))       # drop iff top23 < thresh
        seed_mix = seed_ref[0] * jnp.int32(-1640531527)             # seed * 0x9E3779B9 (wraps)
        base = pl.program_id(0) * (seq_tile * Wx)                   # scalar global offset
        rows = jax.lax.broadcasted_iota(jnp.int32, (tS, W), 0)
        cols = jax.lax.broadcasted_iota(jnp.int32, (tS, W), 1)
        idx0 = rows * Wx + cols + base                              # hoisted out of chunk loop

    for r in range(reps):                                           # static unrolled chunk loop
        lo = r * W
        y = x_ref[:, lo:lo + W] + pe_blk                            # pure streaming VPU add
        if dropout_p > 0.0:
            # Counter-based hash (lowbias32 without the final low-bit xorshift; we only use
            # the top 23 bits).  Integer threshold + fused select*scale.
            h = ((idx0 + lo) ^ seed_mix).astype(jnp.uint32)
            h = (h ^ (h >> 16)) * jnp.uint32(0x7FEB352D)
            h = (h ^ (h >> 15)) * jnp.uint32(0x846CA68B)
            keep = (h >> 9).astype(jnp.int32) >= thresh
            y = jnp.where(keep, y * keep_scale, jnp.zeros_like(y))
        o_ref[:, lo:lo + W] = y.astype(o_ref.dtype)


def _choose_seq_tile(seq_len, row_bytes, budget_bytes, *, min_tile_bytes=512 * 1024,
                     target_steps=4):
    """Largest multiple-of-8 row count under the byte budget; whole extent if it fits.
    Splits into >= target_steps grid steps when tiles can stay >= min_tile_bytes
    (>= 2 pipelined steps per TensorCore on v7x)."""
    row_bytes = max(int(row_bytes), 1)
    cap_rows = max(8, (budget_bytes // row_bytes) // 8 * 8)
    tile = seq_len if seq_len <= cap_rows else cap_rows             # full extent or mult-of-8
    if _cdiv(seq_len, tile) < target_steps:
        split = ((_cdiv(seq_len, target_steps) + 7) // 8) * 8
        if 8 <= split < tile and split * row_bytes >= min_tile_bytes:
            tile = split
    return tile


def fixed_positional_encoding(x, pe_table, *, dropout_p=0.1, training=False, seed=0,
                              tile_budget_bytes=4 << 20, donate_x=False):
    """x: [S, B, D]; pe_table: [max_len, D] from build_positional_encoding.

    Returns dropout(x + pe[:S]); eval mode (training=False) is the identity dropout.
    """
    S, B, D = x.shape
    assert pe_table.shape[0] >= S and pe_table.shape[1] == D
    assert 0.0 <= dropout_p < 1.0
    itemsize = x.dtype.itemsize
    Wx = B * D

    pe_s = pe_table[:S].astype(x.dtype)                  # compact (S, D), pre-cast to x.dtype
    # Pick the pe presentation width W so the kernel's per-chunk column slices are either
    # the whole tile (reps == 1) or 128-lane aligned (no intra-vreg lane replication).
    if B == 1 or D % 128 == 0:
        W = D                                            # compact pe, per-batch chunk adds
    else:
        L = (D * 128) // math.gcd(D, 128)                # lcm(D, 128)
        if Wx % L == 0:
            W = L
            pe_s = jnp.tile(pe_s, (1, L // D))           # one-time lane-aligned pre-tile
        else:
            W = Wx
            pe_s = jnp.tile(pe_s, (1, B))                # full pre-tile: kernel is x + pe
    x2 = x.reshape(S, Wx)                                # free view: lane-dense trailing dim

    tS = _choose_seq_tile(S, Wx * itemsize, tile_budget_bytes)
    grid = (_cdiv(S, tS),)                               # padded tail block if tS doesn't divide S

    p = float(dropout_p) if training else 0.0
    kernel = functools.partial(_pe_dropout_kernel, seq_tile=tS, dropout_p=p)

    # Double-buffered in + out + pe tiles; static conservative cap fits v7x's 64 MiB/TC.
    tile_bytes = tS * Wx * itemsize
    est_vmem = 4 * tile_bytes + 2 * tS * W * itemsize
    vmem_limit = int(min(max(est_vmem + (16 << 20), 32 << 20), 48 << 20))

    out2 = pl.pallas_call(
        kernel,
        out_shape=jax.ShapeDtypeStruct((S, Wx), x.dtype),
        grid_spec=pltpu.PrefetchScalarGridSpec(
            num_scalar_prefetch=1,                       # dropout seed lives in SMEM
            grid=grid,
            in_specs=[
                pl.BlockSpec((tS, Wx), lambda i, seed_ref: (i, 0)),
                pl.BlockSpec((tS, W), lambda i, seed_ref: (i, 0)),   # pe streamed per tile
            ],
            out_specs=pl.BlockSpec((tS, Wx), lambda i, seed_ref: (i, 0)),
        ),
        compiler_params=pltpu.CompilerParams(
            dimension_semantics=("parallel",),
            vmem_limit_bytes=vmem_limit,
        ),
        input_output_aliases=({1: 0} if donate_x else {}),   # x2 is operand 1 (after seed)
    )(jnp.asarray([seed], dtype=jnp.int32), x2, pe_s)

    return out2.reshape(S, B, D)


if __name__ == "__main__":
    max_len, scale_factor, dropout_p = 1024, 1.0, 0.1
    key = jax.random.PRNGKey(0)

    cases = [
        (8, 2, 128),    # lane-aligned d_model: compact pe, per-batch chunk adds
        (16, 2, 32),    # module-typical d_model=32, B*D < 128: pe pre-tiled to slab width
        (24, 8, 32),    # d_model=32, B*D multiple of 128: pe pre-tiled to lcm(D,128)=128
    ]

    for idx, (S, B, D) in enumerate(cases):
        x = jax.random.normal(jax.random.fold_in(key, idx), (S, B, D), dtype=jnp.float32)
        pe = build_positional_encoding(D, max_len=max_len, scale_factor=scale_factor,
                                       dtype=x.dtype)
        ref = x + pe[:S][:, None, :]

        # Eval mode: dropout is identity -> exact match against a plain-JAX reference.
        out = jax.block_until_ready(
            fixed_positional_encoding(x, pe, dropout_p=dropout_p, training=False))
        assert out.shape == (S, B, D)
        assert jnp.allclose(out, ref, atol=1e-6), f"case {idx}: eval-mode mismatch vs reference"

        # Training mode: fused inverted dropout (kept entries scaled by 1/(1-p), dropped == 0).
        out_tr = jax.block_until_ready(
            fixed_positional_encoding(x, pe, dropout_p=dropout_p, training=True, seed=7))
        assert out_tr.shape == (S, B, D)
        kept = out_tr != 0
        expected_kept = ref * (1.0 / (1.0 - dropout_p))
        assert jnp.allclose(jnp.where(kept, out_tr, 0.0),
                            jnp.where(kept, expected_kept, 0.0), atol=1e-5), \
            f"case {idx}: training-mode kept values mismatch"
        drop_frac = float(1.0 - jnp.mean(kept.astype(jnp.float32)))
        assert 0.0 < drop_frac < 0.4, f"case {idx}: unexpected dropout fraction: {drop_frac:.3f}"

    print("KERNEL_OK")
</pallas_src>

<mosaic_0001>
module attributes {stable_mosaic.version = 11 : i64} {
  func.func @_pe_dropout_kernel(%arg0: i32, %arg1: memref<1xi32, #tpu.memory_space<smem>>, %arg2: memref<8x256xf32, #tpu.memory_space<vmem>>, %arg3: memref<8x128xf32, #tpu.memory_space<vmem>>, %arg4: memref<8x256xf32, #tpu.memory_space<vmem>>) attributes {dimension_semantics = [#tpu.dimension_semantics<parallel>], iteration_bounds = array<i64: 1>, scalar_prefetch = 1 : i64, scratch_operands = 0 : i64, tpu.core_type = #tpu.core_type<tc>, window_params = [{transform_indices = @transform_0, window_bounds = array<i64: 8, 256>}, {transform_indices = @transform_1, window_bounds = array<i64: 8, 128>}, {transform_indices = @transform_2, window_bounds = array<i64: 8, 256>}]} {
    %c0 = arith.constant 0 : index
    %c0_0 = arith.constant 0 : index
    %0 = vector.load %arg3[%c0, %c0_0] : memref<8x128xf32, #tpu.memory_space<vmem>>, vector<8x128xf32>
    %c0_1 = arith.constant 0 : index
    %c0_2 = arith.constant 0 : index
    %1 = vector.load %arg2[%c0_1, %c0_2] : memref<8x256xf32, #tpu.memory_space<vmem>>, vector<8x128xf32>
    %2 = arith.addf %1, %0 : vector<8x128xf32>
    %c0_3 = arith.constant 0 : index
    %c0_4 = arith.constant 0 : index
    %3 = vector.load %arg4[%c0_3, %c0_4] : memref<8x256xf32, #tpu.memory_space<vmem>>, vector<8x128xf32>
    tpu.vector_store %arg4[%c0_3, %c0_4], %2 {strides = array<i32>} : memref<8x256xf32, #tpu.memory_space<vmem>>, vector<8x128xf32>,
    %c0_5 = arith.constant 0 : index
    %c128 = arith.constant 128 : index
    %4 = vector.load %arg2[%c0_5, %c128] : memref<8x256xf32, #tpu.memory_space<vmem>>, vector<8x128xf32>
    %5 = arith.addf %4, %0 : vector<8x128xf32>
    %c0_6 = arith.constant 0 : index
    %c128_7 = arith.constant 128 : index
    %6 = vector.load %arg4[%c0_6, %c128_7] : memref<8x256xf32, #tpu.memory_space<vmem>>, vector<8x128xf32>
    tpu.vector_store %arg4[%c0_6, %c128_7], %5 {strides = array<i32>} : memref<8x256xf32, #tpu.memory_space<vmem>>, vector<8x128xf32>,
    return
  }
  func.func @transform_0(%arg0: i32, %arg1: memref<1xi32, #tpu.memory_space<smem>>) -> (i32, i32) {
    %c0_i32 = arith.constant 0 : i32
    %c0_i32_0 = arith.constant 0 : i32
    return %arg0, %c0_i32 : i32, i32
  }
  func.func @transform_1(%arg0: i32, %arg1: memref<1xi32, #tpu.memory_space<smem>>) -> (i32, i32) {
    %c0_i32 = arith.constant 0 : i32
    %c0_i32_0 = arith.constant 0 : i32
    return %arg0, %c0_i32 : i32, i32
  }
  func.func @transform_2(%arg0: i32, %arg1: memref<1xi32, #tpu.memory_space<smem>>) -> (i32, i32) {
    %c0_i32 = arith.constant 0 : i32
    %c0_i32_0 = arith.constant 0 : i32
    return %arg0, %c0_i32 : i32, i32
  }
}

</mosaic_0001>

<llo_original>
// kernel: tpu_custom_call.1
$region0: #{tpu_custom_call.1}
  #allocation0 [shape = 'u32[]', space=smem, size = 0x4, offset = 0x4, fixed_abs, tag = 'smem constant byte address 0x4 - core index']
  #allocation1 [shape = 'u32[72,128]{1,0:T(1,128)}', space=vmem, size = 0x9000, scoped, tag = 'internal scratch']
  #allocation2 [shape = 's32[1]{0}', space=sflag, size = 0x4, scoped, tag = 'scoped memory for tpu_custom_call.1']
  #allocation3 [shape = 's32[1]{0:T(128)S(6)}', space=smem, size = 0x200, scoped, tag = 'prefetched SMEM operand 0']
  %s0 = inlined_call_operand.<no memory space> [shape: s32[1], index: 0, kind: input, shape index: {}]
  %s1 = inlined_call_operand.hbm [shape: f32[8,256], index: 1, kind: input, shape index: {}]
  %s2 = inlined_call_operand.hbm [shape: f32[8,128], index: 2, kind: input, shape index: {}]
  %s3 = inlined_call_operand.hbm [shape: f32[8,256], index: 3, kind: output, shape index: {}]
  %s4 = sld [smem:[#allocation0]]
  $region26: #{tpu_custom_call.1} parent=0
    _
  %s6 = ssub.s32 1, %s4
  %s7 = scalar_select 0, %s6, %s4
  %8 = sst [smem:[#allocation3]] %s0
  $region1: #{tpu_custom_call.1} parent=0
    #allocation4 [shape = 'u8[8192]{0}', space=vmem, size = 0x2000, scoped, tag = 'input window, operand 1, single buffered']
    #allocation5 [shape = 's32[1]{0}', space=sflag, size = 0x4, scoped, tag = 'scoped memory for tpu_custom_call.1']
    #allocation6 [shape = 's32[1]{0}', space=sflag, size = 0x4, scoped, tag = 'scoped memory for tpu_custom_call.1']
    #allocation7 [shape = 'u8[4096]{0}', space=vmem, size = 0x1000, scoped, tag = 'input window, operand 2, single buffered']
    #allocation8 [shape = 's32[1]{0}', space=sflag, size = 0x4, scoped, tag = 'scoped memory for tpu_custom_call.1']
    #allocation9 [shape = 'u8[8192]{0}', space=vmem, size = 0x2000, scoped, tag = 'output window, operand 0, single buffered']
    %9 = vsyncpa [#allocation5], 0
    %10 = vsyncpa [#allocation8], 0
    %11 = vsyncpa [#allocation6], 0
    // Predicated region
    $region2: #{tpu_custom_call.1} parent=1 // pred_check
      _
    $region3: #{tpu_custom_call.1} parent=1 // pred_check_branch
      %13 = sbr.rel (0) target = $region5
    $region4: #{tpu_custom_call.1} parent=1 // pred_region
      %15 = vsyncadd [#allocation5], 0
      %s17 = sshll.u32 %s1, 4
      %s18 = int_to_ptr.hbm [resolvable:$true] %s17
      %s19 = sshll.u32 [#allocation4], 4
      %s20 = int_to_ptr.vmem [resolvable:$true] %s19
      %22 = dma.hbm_to_vmem [thread:$0]  %s18, 256, %s20, [#allocation5]
    $region5: #{tpu_custom_call.1} parent=1 // pred_fallthru
      _
    // Predicated region
    $region6: #{tpu_custom_call.1} parent=1 // pred_check
      _
    $region7: #{tpu_custom_call.1} parent=1 // pred_check_branch
      %24 = sbr.rel (0) target = $region9
    $region8: #{tpu_custom_call.1} parent=1 // pred_region
      %26 = vsyncadd [#allocation8], 0
      %s28 = sshll.u32 %s2, 4
      %s29 = int_to_ptr.hbm [resolvable:$true] %s28
      %s30 = sshll.u32 [#allocation7], 4
      %s31 = int_to_ptr.vmem [resolvable:$true] %s30
      %33 = dma.hbm_to_vmem [thread:$0]  %s29, 128, %s31, [#allocation8]
    $region9: #{tpu_custom_call.1} parent=1 // pred_fallthru
      _
    // Predicated region
    $region10: #{tpu_custom_call.1} parent=1 // pred_check
      _
    $region11: #{tpu_custom_call.1} parent=1 // pred_check_branch
      %35 = sbr.rel (0) target = $region13
    $region12: #{tpu_custom_call.1} parent=1 // pred_region
      %37 = dma.done [#allocation5], 256
    $region13: #{tpu_custom_call.1} parent=1 // pred_fallthru
      _
    // Predicated region
    $region14: #{tpu_custom_call.1} parent=1 // pred_check
      _
    $region15: #{tpu_custom_call.1} parent=1 // pred_check_branch
      %39 = sbr.rel (0) target = $region17
    $region16: #{tpu_custom_call.1} parent=1 // pred_region
      %41 = dma.done [#allocation8], 128
    $region17: #{tpu_custom_call.1} parent=1 // pred_fallthru
      _
    %v42 = vld [vmem:[#allocation7] sm:$0xff]
    %v43 = vld [vmem:[#allocation4] sm:$0xff]
    %v44 = vadd.f32 %v43, %v42
    %45 = vst [vmem:[#allocation9] sm:$0xff] %v44
    %v46 = vld [vmem:[#allocation4 + $0x8] sm:$0xff]
    %v47 = vadd.f32 %v46, %v42
    %48 = vst [vmem:[#allocation9 + $0x8] sm:$0xff] %v47
    // Predicated region
    $region18: #{tpu_custom_call.1} parent=1 // pred_check
      _
    $region19: #{tpu_custom_call.1} parent=1 // pred_check_branch
      %50 = sbr.rel (0) target = $region21
    $region20: #{tpu_custom_call.1} parent=1 // pred_region
      %52 = vsyncadd [#allocation6], 0
      %s54 = sshll.u32 [#allocation9], 4
      %s55 = int_to_ptr.vmem [resolvable:$true] %s54
      %s56 = sshll.u32 %s3, 4
      %s57 = int_to_ptr.hbm [resolvable:$true] %s56
      %59 = dma.vmem_to_hbm [thread:$0]  %s55, 256, %s57, [#allocation6]
    $region21: #{tpu_custom_call.1} parent=1 // pred_fallthru
      _
    // Predicated region
    $region22: #{tpu_custom_call.1} parent=1 // pred_check
      _
    $region23: #{tpu_custom_call.1} parent=1 // pred_check_branch
      %61 = sbr.rel (0) target = $region25
    $region24: #{tpu_custom_call.1} parent=1 // pred_region
      %63 = dma.done [#allocation6], 256
    $region25: #{tpu_custom_call.1} parent=1 // pred_fallthru
      _
    %64 = vsyncpa [#allocation5], 1
    %65 = vsyncpa [#allocation8], 1
    %66 = vsyncpa [#allocation6], 1

</llo_original>
